<compile_context>
chip_gen: v7x
topology: tpu7x:2x2x1
jax: 0.10.0
libtpu: 0.0.40
codegen_flags: <defaults>
</compile_context>

<pallas_src>
import functools

import jax
import jax.numpy as jnp
from jax import lax
from jax.experimental import pallas as pl
from jax.experimental.pallas import tpu as pltpu
import numpy as np


def _basic_block_kernel(x_ref,                       # (Nb, C0, HW)  x dtype
                        mask_ref,                    # (9, 1, Nb*HW) f32 (0/1)
                        w1_ref, b1_ref,              # (C1, C0) cd,  (C1, 1) f32
                        w2_ref, b2_ref,              # (C2, 9*C1) cd,(C2, 1) f32
                        w3_ref, b3_ref,              # (C3, C2) cd,  (C3, 1) f32
                        out_ref,                     # (Nb, C3, HW)  out dtype
                        *, W, HW, compute_dtype):
    cd = compute_dtype
    nb = x_ref.shape[0]
    L = nb * HW

    # Lane-dense activation slab (C0, Nb*HW); static concat over the (small)
    # per-step image count keeps lanes H*W-major per image, so rolls/masks see
    # per-image pixel coordinates.
    if nb == 1:
        x = x_ref[0]
    else:
        x = jnp.concatenate([x_ref[n] for n in range(nb)], axis=-1)
    x_f32 = x.astype(jnp.float32)                    # residual path stays f32

    # ---- conv1 (1x1, BN scale folded into weights) + bias + ReLU ----
    h1 = jnp.dot(w1_ref[...], x.astype(cd), preferred_element_type=jnp.float32)
    h1 = jnp.maximum(h1 + b1_ref[...], 0.0)          # (C1, L) f32

    # ---- conv2 (3x3, stride 1, pad 1): im2col via lane rolls + precomputed
    #      edge masks, single K = 9*C1 matmul ----
    cols = []
    k = 0
    for dy in (-1, 0, 1):
        for dx in (-1, 0, 1):
            off = dy * W + dx                        # source offset in flat H*W
            shifted = pltpu.roll(h1, (-off) % L, 1) if off else h1   # XLU
            # Mask in f32 (exact 0/1; also the fast path on v5e which has no
            # bf16 VPU), cast per column so the im2col slab is built directly
            # in compute dtype.
            cols.append((shifted * mask_ref[k]).astype(cd))
            k += 1
    im2col = jnp.concatenate(cols, axis=0)           # (9*C1, L) compute dtype

    h2 = jnp.dot(w2_ref[...], im2col, preferred_element_type=jnp.float32)
    h2 = jnp.maximum(h2 + b2_ref[...], 0.0)          # (C2, L) f32

    # ---- conv3 (1x1, BN scale folded) + bias + residual + ReLU ----
    h3 = jnp.dot(w3_ref[...], h2.astype(cd), preferred_element_type=jnp.float32)
    h3 = jnp.maximum(h3 + b3_ref[...] + x_f32, 0.0)  # (C3, L) f32, C3 == C0

    if nb == 1:
        out_ref[0] = h3.astype(out_ref.dtype)
    else:
        for n in range(nb):
            out_ref[n] = h3[:, n * HW:(n + 1) * HW].astype(out_ref.dtype)


def _edge_masks(H, W, nb, dtype=jnp.float32):
    """Host-precomputed 0/1 masks zeroing padding / wrap-around lanes, per tap."""
    py = np.arange(H)
    px = np.arange(W)
    rows = []
    for dy in (-1, 0, 1):
        vy = (py + dy >= 0) & (py + dy < H)
        for dx in (-1, 0, 1):
            vx = (px + dx >= 0) & (px + dx < W)
            m = (vy[:, None] & vx[None, :]).reshape(-1)     # (H*W,)
            rows.append(np.tile(m, nb))
    return jnp.asarray(np.stack(rows)[:, None, :], dtype=dtype)  # (9, 1, nb*H*W)


def _vmem_bytes(nb, C0, C1, C2, C3, HW, x_bytes, out_bytes, cd_bytes):
    """Rough per-step VMEM footprint estimate (blocks double-buffered + temps)."""
    L = nb * HW
    io_blocks = 2 * nb * HW * (C0 * x_bytes + C3 * out_bytes)
    params = 2 * ((C1 * C0 + C2 * 9 * C1 + C3 * C2) * cd_bytes
                  + (C1 + C2 + C3) * 4 + 9 * L * 4)
    interm = L * (C0 * 4 + C0 * cd_bytes + C1 * 4 + 9 * C1 * cd_bytes
                  + C2 * 4 + C2 * cd_bytes + 2 * C3 * 4)
    return io_blocks + params + interm


def resnet_basic_block(x_nchw, params, *, stride=1, compute_dtype=jnp.bfloat16,
                       out_dtype=None, images_per_step=None,
                       vmem_budget_bytes=40 * 1024 * 1024):
    """x_nchw: (N, C0, H, W) float32 or bfloat16. Returns (N, C3, H, W) out_dtype."""
    assert stride == 1, "stride != 1 breaks the residual add (as in the PyTorch module)"
    w1, b1, w2, b2, w3, b3 = params
    N, C0, H, W = x_nchw.shape
    C1, C2, C3 = w1.shape[0], w2.shape[0], w3.shape[0]
    assert C0 == C3, "channels[0] must equal channels[3] for the residual add"
    assert w1.shape[1] == C0 and w2.shape[1] == 9 * C1 and w3.shape[1] == C2
    HW = H * W
    out_dtype = x_nchw.dtype if out_dtype is None else out_dtype

    x_bytes = jnp.dtype(x_nchw.dtype).itemsize
    out_bytes = jnp.dtype(out_dtype).itemsize
    cd_bytes = jnp.dtype(compute_dtype).itemsize

    # Batch as many images per grid step as fit a VMEM budget (amortizes
    # per-step overhead and widens the matmul lane dimension to Nb*HW).
    if images_per_step is None:
        nb = 1
        for d in range(1, N + 1):
            if N % d == 0 and _vmem_bytes(d, C0, C1, C2, C3, HW, x_bytes,
                                          out_bytes, cd_bytes) <= vmem_budget_bytes:
                nb = d
    else:
        nb = images_per_step
        assert N % nb == 0
    est = _vmem_bytes(nb, C0, C1, C2, C3, HW, x_bytes, out_bytes, cd_bytes)
    vmem_limit = int(min(96 * 1024 * 1024, max(32 * 1024 * 1024, 1.5 * est)))

    x = x_nchw.reshape(N, C0, HW)                    # NCHW -> (N, C, H*W): free reshape
    masks = _edge_masks(H, W, nb, jnp.float32)

    kernel = functools.partial(_basic_block_kernel, W=W, HW=HW,
                               compute_dtype=compute_dtype)

    def const_spec(arr):
        nd = arr.ndim
        return pl.BlockSpec(arr.shape, lambda n, _nd=nd: (0,) * _nd)

    out = pl.pallas_call(
        kernel,
        out_shape=jax.ShapeDtypeStruct((N, C3, HW), out_dtype),
        grid=(N // nb,),
        in_specs=[
            pl.BlockSpec((nb, C0, HW), lambda n: (n, 0, 0)),
            const_spec(masks),
            const_spec(w1), const_spec(b1),
            const_spec(w2), const_spec(b2),
            const_spec(w3), const_spec(b3),
        ],
        out_specs=pl.BlockSpec((nb, C3, HW), lambda n: (n, 0, 0)),
        compiler_params=pltpu.CompilerParams(
            dimension_semantics=("parallel",),
            vmem_limit_bytes=vmem_limit),
    )(x, masks, w1, b1, w2, b2, w3, b3)
    return out.reshape(N, C3, H, W)


def make_params(key, channels):
    """Deterministic synthetic parameters: HWIO conv weights + raw BN params."""
    c0, c1, c2, c3 = channels
    k = jax.random.split(key, 6)

    def conv_w(kk, kh, kw, cin, cout):
        fan_in = kh * kw * cin
        return (jax.random.normal(kk, (kh, kw, cin, cout), jnp.float32)
                / np.sqrt(fan_in)).astype(jnp.float32)

    def bn(kk, c):
        kg, kb, km, kv = jax.random.split(kk, 4)
        gamma = 0.5 + jax.random.uniform(kg, (c,), jnp.float32)
        beta = 0.1 * jax.random.normal(kb, (c,), jnp.float32)
        mean = 0.1 * jax.random.normal(km, (c,), jnp.float32)
        var = 0.5 + jax.random.uniform(kv, (c,), jnp.float32)
        return gamma, beta, mean, var

    hwio = (conv_w(k[0], 1, 1, c0, c1),
            conv_w(k[1], 3, 3, c1, c2),
            conv_w(k[2], 1, 1, c2, c3))
    bn_params = (bn(k[3], c1), bn(k[4], c2), bn(k[5], c3))
    return hwio, bn_params


def prepare_kernel_params(hwio_weights, bn_params, compute_dtype=jnp.bfloat16, eps=1e-5):
    """Fold eval-mode BN scale into conv weights; emit (Cout, K) matmul weights."""
    w1_hwio, w2_hwio, w3_hwio = hwio_weights

    def fold(p):
        g, b, m, v = p
        scale = g / jnp.sqrt(v + eps)
        return scale, b - m * scale

    s1, bb1 = fold(bn_params[0])
    s2, bb2 = fold(bn_params[1])
    s3, bb3 = fold(bn_params[2])
    c1 = w1_hwio.shape[3]
    c2 = w2_hwio.shape[3]
    c3 = w3_hwio.shape[3]

    w1 = (w1_hwio[0, 0] * s1[None, :]).T.astype(compute_dtype)             # (C1, C0)
    w2 = (w2_hwio.reshape(-1, c2) * s2[None, :]).T.astype(compute_dtype)   # (C2, 9*C1)
    w3 = (w3_hwio[0, 0] * s3[None, :]).T.astype(compute_dtype)             # (C3, C2)
    return (w1, bb1.reshape(c1, 1).astype(jnp.float32),
            w2, bb2.reshape(c2, 1).astype(jnp.float32),
            w3, bb3.reshape(c3, 1).astype(jnp.float32))


def reference_block(x_nchw, hwio_weights, bn_params, eps=1e-5):
    """Pure-JAX reference for numerical validation."""
    w1, w2, w3 = hwio_weights
    x = jnp.transpose(x_nchw, (0, 2, 3, 1))
    dn = ("NHWC", "HWIO", "NHWC")
    conv = functools.partial(lax.conv_general_dilated,
                             window_strides=(1, 1), dimension_numbers=dn,
                             precision=lax.Precision.HIGHEST)

    def bn(h, p):
        g, b, m, v = p
        return (h - m) * (g / jnp.sqrt(v + eps)) + b

    h = jnp.maximum(bn(conv(x, w1, padding="VALID"), bn_params[0]), 0.0)
    h = jnp.maximum(bn(conv(h, w2, padding="SAME"), bn_params[1]), 0.0)
    h = bn(conv(h, w3, padding="VALID"), bn_params[2])
    return jnp.transpose(jnp.maximum(h + x, 0.0), (0, 3, 1, 2))


if __name__ == "__main__":
    key = jax.random.PRNGKey(0)
    channels = [8, 16, 32, 8]   # channels[0] == channels[3] so the residual add is valid
    N, H, W = 2, 16, 16

    k_x, k_p = jax.random.split(key)
    x = jax.random.normal(k_x, (N, channels[0], H, W), jnp.float32)
    hwio_weights, bn_params = make_params(k_p, channels)

    ref = jax.block_until_ready(reference_block(x, hwio_weights, bn_params))

    # Default path: bf16 MXU inputs (native fast path on v5e/v6e/v7x), f32 I/O,
    # f32 accumulation / bias / residual / ReLU, whole batch in one grid step.
    params_bf16 = prepare_kernel_params(hwio_weights, bn_params, jnp.bfloat16)
    out_bf16 = jax.block_until_ready(
        resnet_basic_block(x, params_bf16, compute_dtype=jnp.bfloat16))
    assert out_bf16.shape == (N, channels[3], H, W)
    assert np.allclose(np.asarray(out_bf16), np.asarray(ref), rtol=5e-2, atol=5e-2)

    # Full-precision MXU path (reference accuracy check).
    params_f32 = prepare_kernel_params(hwio_weights, bn_params, jnp.float32)
    out_f32 = jax.block_until_ready(
        resnet_basic_block(x, params_f32, compute_dtype=jnp.float32))
    assert np.allclose(np.asarray(out_f32), np.asarray(ref), rtol=1e-2, atol=1e-2)

    # bf16 HBM I/O path: halves input/output bytes for the HBM-bound regime at
    # real shapes; residual add still happens in f32 after upcast.
    x_bf16 = x.astype(jnp.bfloat16)
    ref_bf_in = jax.block_until_ready(
        reference_block(x_bf16.astype(jnp.float32), hwio_weights, bn_params))
    out_io16 = jax.block_until_ready(
        resnet_basic_block(x_bf16, params_bf16, compute_dtype=jnp.bfloat16,
                           out_dtype=jnp.bfloat16))
    assert out_io16.dtype == jnp.bfloat16
    assert np.allclose(np.asarray(out_io16, dtype=np.float32),
                       np.asarray(ref_bf_in), rtol=1e-1, atol=1e-1)

    print("KERNEL_OK")
</pallas_src>

<mosaic_0001>
module attributes {stable_mosaic.version = 11 : i64} {
  func.func @_basic_block_kernel(%arg0: i32, %arg1: memref<2x8x256xf32, #tpu.memory_space<vmem>>, %arg2: memref<9x1x512xf32, #tpu.memory_space<vmem>>, %arg3: memref<16x8xbf16, #tpu.memory_space<vmem>>, %arg4: memref<16x1xf32, #tpu.memory_space<vmem>>, %arg5: memref<32x144xbf16, #tpu.memory_space<vmem>>, %arg6: memref<32x1xf32, #tpu.memory_space<vmem>>, %arg7: memref<8x32xbf16, #tpu.memory_space<vmem>>, %arg8: memref<8x1xf32, #tpu.memory_space<vmem>>, %arg9: memref<2x8x256xf32, #tpu.memory_space<vmem>>) attributes {dimension_semantics = [#tpu.dimension_semantics<parallel>], iteration_bounds = array<i64: 1>, scalar_prefetch = 0 : i64, scratch_operands = 0 : i64, tpu.core_type = #tpu.core_type<tc>, window_params = [{transform_indices = @transform_0, window_bounds = array<i64: 2, 8, 256>}, {pipeline_mode = #tpu.pipeline_mode<synchronous>, transform_indices = @transform_1, window_bounds = array<i64: 9, 1, 512>}, {pipeline_mode = #tpu.pipeline_mode<synchronous>, transform_indices = @transform_2, window_bounds = array<i64: 16, 8>}, {pipeline_mode = #tpu.pipeline_mode<synchronous>, transform_indices = @transform_3, window_bounds = array<i64: 16, 1>}, {pipeline_mode = #tpu.pipeline_mode<synchronous>, transform_indices = @transform_4, window_bounds = array<i64: 32, 144>}, {pipeline_mode = #tpu.pipeline_mode<synchronous>, transform_indices = @transform_5, window_bounds = array<i64: 32, 1>}, {pipeline_mode = #tpu.pipeline_mode<synchronous>, transform_indices = @transform_6, window_bounds = array<i64: 8, 32>}, {pipeline_mode = #tpu.pipeline_mode<synchronous>, transform_indices = @transform_7, window_bounds = array<i64: 8, 1>}, {transform_indices = @transform_8, window_bounds = array<i64: 2, 8, 256>}]} {
    %c0 = arith.constant 0 : index
    %c0_0 = arith.constant 0 : index
    %c0_1 = arith.constant 0 : index
    %0 = vector.load %arg1[%c0, %c0_0, %c0_1] : memref<2x8x256xf32, #tpu.memory_space<vmem>>, vector<1x8x256xf32>
    %1 = vector.shape_cast %0 : vector<1x8x256xf32> to vector<8x256xf32>
    %c1 = arith.constant 1 : index
    %c0_2 = arith.constant 0 : index
    %c0_3 = arith.constant 0 : index
    %2 = vector.load %arg1[%c1, %c0_2, %c0_3] : memref<2x8x256xf32, #tpu.memory_space<vmem>>, vector<1x8x256xf32>
    %3 = vector.shape_cast %2 : vector<1x8x256xf32> to vector<8x256xf32>
    %4 = tpu.concatenate %1, %3 in 1 : vector<8x256xf32>, vector<8x256xf32> -> vector<8x512xf32>
    %c0_4 = arith.constant 0 : index
    %c0_5 = arith.constant 0 : index
    %5 = vector.load %arg3[%c0_4, %c0_5] : memref<16x8xbf16, #tpu.memory_space<vmem>>, vector<16x8xbf16>
    %6 = arith.truncf %4 : vector<8x512xf32> to vector<8x512xbf16>
    %cst = arith.constant dense<0.000000e+00> : vector<16x512xf32>
    %7 = tpu.matmul %5, %6, %cst {dimension_numbers = #tpu.dot_dimension_numbers<[1], [0], [0], [1], [0, 0, 1, 1], [], []>} : vector<16x8xbf16>, vector<8x512xbf16>, vector<16x512xf32> -> vector<16x512xf32>
    %c0_6 = arith.constant 0 : index
    %c0_7 = arith.constant 0 : index
    %8 = vector.load %arg4[%c0_6, %c0_7] : memref<16x1xf32, #tpu.memory_space<vmem>>, vector<16x1xf32>
    %9 = vector.broadcast %8 : vector<16x1xf32> to vector<16x512xf32>
    %10 = arith.addf %7, %9 : vector<16x512xf32>
    %cst_8 = arith.constant 0.000000e+00 : f32
    %11 = vector.broadcast %cst_8 : f32 to vector<16x512xf32>
    %12 = arith.maximumf %10, %11 : vector<16x512xf32>
    %c17_i32 = arith.constant 17 : i32
    %13 = tpu.dynamic_rotate %12 by %c17_i32 dim 1 : vector<16x512xf32>, i32 -> vector<16x512xf32>
    %c0_9 = arith.constant 0 : index
    %c0_10 = arith.constant 0 : index
    %c0_11 = arith.constant 0 : index
    %14 = vector.load %arg2[%c0_9, %c0_10, %c0_11] : memref<9x1x512xf32, #tpu.memory_space<vmem>>, vector<1x1x512xf32>
    %15 = vector.shape_cast %14 : vector<1x1x512xf32> to vector<1x512xf32>
    %16 = vector.broadcast %15 : vector<1x512xf32> to vector<16x512xf32>
    %17 = arith.mulf %13, %16 : vector<16x512xf32>
    %18 = arith.truncf %17 : vector<16x512xf32> to vector<16x512xbf16>
    %c16_i32 = arith.constant 16 : i32
    %19 = tpu.dynamic_rotate %12 by %c16_i32 dim 1 : vector<16x512xf32>, i32 -> vector<16x512xf32>
    %c1_12 = arith.constant 1 : index
    %c0_13 = arith.constant 0 : index
    %c0_14 = arith.constant 0 : index
    %20 = vector.load %arg2[%c1_12, %c0_13, %c0_14] : memref<9x1x512xf32, #tpu.memory_space<vmem>>, vector<1x1x512xf32>
    %21 = vector.shape_cast %20 : vector<1x1x512xf32> to vector<1x512xf32>
    %22 = vector.broadcast %21 : vector<1x512xf32> to vector<16x512xf32>
    %23 = arith.mulf %19, %22 : vector<16x512xf32>
    %24 = arith.truncf %23 : vector<16x512xf32> to vector<16x512xbf16>
    %c15_i32 = arith.constant 15 : i32
    %25 = tpu.dynamic_rotate %12 by %c15_i32 dim 1 : vector<16x512xf32>, i32 -> vector<16x512xf32>
    %c2 = arith.constant 2 : index
    %c0_15 = arith.constant 0 : index
    %c0_16 = arith.constant 0 : index
    %26 = vector.load %arg2[%c2, %c0_15, %c0_16] : memref<9x1x512xf32, #tpu.memory_space<vmem>>, vector<1x1x512xf32>
    %27 = vector.shape_cast %26 : vector<1x1x512xf32> to vector<1x512xf32>
    %28 = vector.broadcast %27 : vector<1x512xf32> to vector<16x512xf32>
    %29 = arith.mulf %25, %28 : vector<16x512xf32>
    %30 = arith.truncf %29 : vector<16x512xf32> to vector<16x512xbf16>
    %c1_i32 = arith.constant 1 : i32
    %31 = tpu.dynamic_rotate %12 by %c1_i32 dim 1 : vector<16x512xf32>, i32 -> vector<16x512xf32>
    %c3 = arith.constant 3 : index
    %c0_17 = arith.constant 0 : index
    %c0_18 = arith.constant 0 : index
    %32 = vector.load %arg2[%c3, %c0_17, %c0_18] : memref<9x1x512xf32, #tpu.memory_space<vmem>>, vector<1x1x512xf32>
    %33 = vector.shape_cast %32 : vector<1x1x512xf32> to vector<1x512xf32>
    %34 = vector.broadcast %33 : vector<1x512xf32> to vector<16x512xf32>
    %35 = arith.mulf %31, %34 : vector<16x512xf32>
    %36 = arith.truncf %35 : vector<16x512xf32> to vector<16x512xbf16>
    %c4 = arith.constant 4 : index
    %c0_19 = arith.constant 0 : index
    %c0_20 = arith.constant 0 : index
    %37 = vector.load %arg2[%c4, %c0_19, %c0_20] : memref<9x1x512xf32, #tpu.memory_space<vmem>>, vector<1x1x512xf32>
    %38 = vector.shape_cast %37 : vector<1x1x512xf32> to vector<1x512xf32>
    %39 = vector.broadcast %38 : vector<1x512xf32> to vector<16x512xf32>
    %40 = arith.mulf %12, %39 : vector<16x512xf32>
    %41 = arith.truncf %40 : vector<16x512xf32> to vector<16x512xbf16>
    %c511_i32 = arith.constant 511 : i32
    %42 = tpu.dynamic_rotate %12 by %c511_i32 dim 1 : vector<16x512xf32>, i32 -> vector<16x512xf32>
    %c5 = arith.constant 5 : index
    %c0_21 = arith.constant 0 : index
    %c0_22 = arith.constant 0 : index
    %43 = vector.load %arg2[%c5, %c0_21, %c0_22] : memref<9x1x512xf32, #tpu.memory_space<vmem>>, vector<1x1x512xf32>
    %44 = vector.shape_cast %43 : vector<1x1x512xf32> to vector<1x512xf32>
    %45 = vector.broadcast %44 : vector<1x512xf32> to vector<16x512xf32>
    %46 = arith.mulf %42, %45 : vector<16x512xf32>
    %47 = arith.truncf %46 : vector<16x512xf32> to vector<16x512xbf16>
    %c497_i32 = arith.constant 497 : i32
    %48 = tpu.dynamic_rotate %12 by %c497_i32 dim 1 : vector<16x512xf32>, i32 -> vector<16x512xf32>
    %c6 = arith.constant 6 : index
    %c0_23 = arith.constant 0 : index
    %c0_24 = arith.constant 0 : index
    %49 = vector.load %arg2[%c6, %c0_23, %c0_24] : memref<9x1x512xf32, #tpu.memory_space<vmem>>, vector<1x1x512xf32>
    %50 = vector.shape_cast %49 : vector<1x1x512xf32> to vector<1x512xf32>
    %51 = vector.broadcast %50 : vector<1x512xf32> to vector<16x512xf32>
    %52 = arith.mulf %48, %51 : vector<16x512xf32>
    %53 = arith.truncf %52 : vector<16x512xf32> to vector<16x512xbf16>
    %c496_i32 = arith.constant 496 : i32
    %54 = tpu.dynamic_rotate %12 by %c496_i32 dim 1 : vector<16x512xf32>, i32 -> vector<16x512xf32>
    %c7 = arith.constant 7 : index
    %c0_25 = arith.constant 0 : index
    %c0_26 = arith.constant 0 : index
    %55 = vector.load %arg2[%c7, %c0_25, %c0_26] : memref<9x1x512xf32, #tpu.memory_space<vmem>>, vector<1x1x512xf32>
    %56 = vector.shape_cast %55 : vector<1x1x512xf32> to vector<1x512xf32>
    %57 = vector.broadcast %56 : vector<1x512xf32> to vector<16x512xf32>
    %58 = arith.mulf %54, %57 : vector<16x512xf32>
    %59 = arith.truncf %58 : vector<16x512xf32> to vector<16x512xbf16>
    %c495_i32 = arith.constant 495 : i32
    %60 = tpu.dynamic_rotate %12 by %c495_i32 dim 1 : vector<16x512xf32>, i32 -> vector<16x512xf32>
    %c8 = arith.constant 8 : index
    %c0_27 = arith.constant 0 : index
    %c0_28 = arith.constant 0 : index
    %61 = vector.load %arg2[%c8, %c0_27, %c0_28] : memref<9x1x512xf32, #tpu.memory_space<vmem>>, vector<1x1x512xf32>
    %62 = vector.shape_cast %61 : vector<1x1x512xf32> to vector<1x512xf32>
    %63 = vector.broadcast %62 : vector<1x512xf32> to vector<16x512xf32>
    %64 = arith.mulf %60, %63 : vector<16x512xf32>
    %65 = arith.truncf %64 : vector<16x512xf32> to vector<16x512xbf16>
    %66 = tpu.concatenate %18, %24, %30, %36, %41, %47, %53, %59, %65 in 0 : vector<16x512xbf16>, vector<16x512xbf16>, vector<16x512xbf16>, vector<16x512xbf16>, vector<16x512xbf16>, vector<16x512xbf16>, vector<16x512xbf16>, vector<16x512xbf16>, vector<16x512xbf16> -> vector<144x512xbf16>
    %c0_29 = arith.constant 0 : index
    %c0_30 = arith.constant 0 : index
    %67 = vector.load %arg5[%c0_29, %c0_30] : memref<32x144xbf16, #tpu.memory_space<vmem>>, vector<32x144xbf16>
    %cst_31 = arith.constant dense<0.000000e+00> : vector<32x512xf32>
    %68 = tpu.matmul %67, %66, %cst_31 {dimension_numbers = #tpu.dot_dimension_numbers<[1], [0], [0], [1], [0, 0, 1, 1], [], []>} : vector<32x144xbf16>, vector<144x512xbf16>, vector<32x512xf32> -> vector<32x512xf32>
    %c0_32 = arith.constant 0 : index
    %c0_33 = arith.constant 0 : index
    %69 = vector.load %arg6[%c0_32, %c0_33] : memref<32x1xf32, #tpu.memory_space<vmem>>, vector<32x1xf32>
    %70 = vector.broadcast %69 : vector<32x1xf32> to vector<32x512xf32>
    %71 = arith.addf %68, %70 : vector<32x512xf32>
    %cst_34 = arith.constant 0.000000e+00 : f32
    %72 = vector.broadcast %cst_34 : f32 to vector<32x512xf32>
    %73 = arith.maximumf %71, %72 : vector<32x512xf32>
    %c0_35 = arith.constant 0 : index
    %c0_36 = arith.constant 0 : index
    %74 = vector.load %arg7[%c0_35, %c0_36] : memref<8x32xbf16, #tpu.memory_space<vmem>>, vector<8x32xbf16>
    %75 = arith.truncf %73 : vector<32x512xf32> to vector<32x512xbf16>
    %cst_37 = arith.constant dense<0.000000e+00> : vector<8x512xf32>
    %76 = tpu.matmul %74, %75, %cst_37 {dimension_numbers = #tpu.dot_dimension_numbers<[1], [0], [0], [1], [0, 0, 1, 1], [], []>} : vector<8x32xbf16>, vector<32x512xbf16>, vector<8x512xf32> -> vector<8x512xf32>
    %c0_38 = arith.constant 0 : index
    %c0_39 = arith.constant 0 : index
    %77 = vector.load %arg8[%c0_38, %c0_39] : memref<8x1xf32, #tpu.memory_space<vmem>>, vector<8x1xf32>
    %78 = vector.broadcast %77 : vector<8x1xf32> to vector<8x512xf32>
    %79 = arith.addf %76, %78 : vector<8x512xf32>
    %80 = arith.addf %79, %4 : vector<8x512xf32>
    %cst_40 = arith.constant 0.000000e+00 : f32
    %81 = vector.broadcast %cst_40 : f32 to vector<8x512xf32>
    %82 = arith.maximumf %80, %81 : vector<8x512xf32>
    %83 = vector.extract_strided_slice %82 {offsets = [0, 0], sizes = [8, 256], strides = [1, 1]} : vector<8x512xf32> to vector<8x256xf32>
    %c0_41 = arith.constant 0 : index
    %c0_42 = arith.constant 0 : index
    %c0_43 = arith.constant 0 : index
    %84 = vector.load %arg9[%c0_41, %c0_42, %c0_43] : memref<2x8x256xf32, #tpu.memory_space<vmem>>, vector<1x8x256xf32>
    %85 = vector.shape_cast %84 : vector<1x8x256xf32> to vector<8x256xf32>
    %86 = vector.shape_cast %83 : vector<8x256xf32> to vector<1x8x256xf32>
    tpu.vector_store %arg9[%c0_41, %c0_42, %c0_43], %86 {strides = array<i32>} : memref<2x8x256xf32, #tpu.memory_space<vmem>>, vector<1x8x256xf32>,
    %87 = vector.extract_strided_slice %82 {offsets = [0, 256], sizes = [8, 256], strides = [1, 1]} : vector<8x512xf32> to vector<8x256xf32>
    %c1_44 = arith.constant 1 : index
    %c0_45 = arith.constant 0 : index
    %c0_46 = arith.constant 0 : index
    %88 = vector.load %arg9[%c1_44, %c0_45, %c0_46] : memref<2x8x256xf32, #tpu.memory_space<vmem>>, vector<1x8x256xf32>
    %89 = vector.shape_cast %88 : vector<1x8x256xf32> to vector<8x256xf32>
    %90 = vector.shape_cast %87 : vector<8x256xf32> to vector<1x8x256xf32>
    tpu.vector_store %arg9[%c1_44, %c0_45, %c0_46], %90 {strides = array<i32>} : memref<2x8x256xf32, #tpu.memory_space<vmem>>, vector<1x8x256xf32>,
    return
  }
  func.func @transform_0(%arg0: i32) -> (i32, i32, i32) {
    %c0_i32 = arith.constant 0 : i32
    %c0_i32_0 = arith.constant 0 : i32
    %c0_i32_1 = arith.constant 0 : i32
    return %arg0, %c0_i32, %c0_i32_0 : i32, i32, i32
  }
  func.func @transform_1(%arg0: i32) -> (i32, i32, i32) {
    %c0_i32 = arith.constant 0 : i32
    %c0_i32_0 = arith.constant 0 : i32
    %c0_i32_1 = arith.constant 0 : i32
    %c0_i32_2 = arith.constant 0 : i32
    return %c0_i32, %c0_i32_0, %c0_i32_1 : i32, i32, i32
  }
  func.func @transform_2(%arg0: i32) -> (i32, i32) {
    %c0_i32 = arith.constant 0 : i32
    %c0_i32_0 = arith.constant 0 : i32
    %c0_i32_1 = arith.constant 0 : i32
    return %c0_i32, %c0_i32_0 : i32, i32
  }
  func.func @transform_3(%arg0: i32) -> (i32, i32) {
    %c0_i32 = arith.constant 0 : i32
    %c0_i32_0 = arith.constant 0 : i32
    %c0_i32_1 = arith.constant 0 : i32
    return %c0_i32, %c0_i32_0 : i32, i32
  }
  func.func @transform_4(%arg0: i32) -> (i32, i32) {
    %c0_i32 = arith.constant 0 : i32
    %c0_i32_0 = arith.constant 0 : i32
    %c0_i32_1 = arith.constant 0 : i32
    return %c0_i32, %c0_i32_0 : i32, i32
  }
  func.func @transform_5(%arg0: i32) -> (i32, i32) {
    %c0_i32 = arith.constant 0 : i32
    %c0_i32_0 = arith.constant 0 : i32
    %c0_i32_1 = arith.constant 0 : i32
    return %c0_i32, %c0_i32_0 : i32, i32
  }
  func.func @transform_6(%arg0: i32) -> (i32, i32) {
    %c0_i32 = arith.constant 0 : i32
    %c0_i32_0 = arith.constant 0 : i32
    %c0_i32_1 = arith.constant 0 : i32
    return %c0_i32, %c0_i32_0 : i32, i32
  }
  func.func @transform_7(%arg0: i32) -> (i32, i32) {
    %c0_i32 = arith.constant 0 : i32
    %c0_i32_0 = arith.constant 0 : i32
    %c0_i32_1 = arith.constant 0 : i32
    return %c0_i32, %c0_i32_0 : i32, i32
  }
  func.func @transform_8(%arg0: i32) -> (i32, i32, i32) {
    %c0_i32 = arith.constant 0 : i32
    %c0_i32_0 = arith.constant 0 : i32
    %c0_i32_1 = arith.constant 0 : i32
    return %arg0, %c0_i32, %c0_i32_0 : i32, i32, i32
  }
}

</mosaic_0001>

<llo_original>
// kernel: tpu_custom_call.1
$region0: #{tpu_custom_call.1}
  #allocation0 [shape = 'u32[]', space=smem, size = 0x4, offset = 0x4, fixed_abs, tag = 'smem constant byte address 0x4 - core index']
  #allocation1 [shape = 'u32[144,128]{1,0:T(1,128)}', space=vmem, size = 0x12000, scoped, tag = 'internal scratch']
  %s0 = inlined_call_operand.vmem [shape: f32[2,8,256], index: 0, kind: input, shape index: {}]
  %s1 = inlined_call_operand.vmem [shape: f32[9,1,512], index: 1, kind: input, shape index: {}]
  %s2 = inlined_call_operand.vmem [shape: bf16[16,8], index: 2, kind: input, shape index: {}]
  %s3 = inlined_call_operand.vmem [shape: f32[16,1], index: 3, kind: input, shape index: {}]
  %s4 = inlined_call_operand.hbm [shape: bf16[32,144], index: 4, kind: input, shape index: {}]
  %s5 = inlined_call_operand.vmem [shape: f32[32,1], index: 5, kind: input, shape index: {}]
  %s6 = inlined_call_operand.vmem [shape: bf16[8,32], index: 6, kind: input, shape index: {}]
  %s7 = inlined_call_operand.vmem [shape: f32[8,1], index: 7, kind: input, shape index: {}]
  %s8 = inlined_call_operand.hbm [shape: f32[2,8,256], index: 8, kind: output, shape index: {}]
  %s9 = sld [smem:[#allocation0]]
  $region46: #{tpu_custom_call.1} parent=0
    _
  %s11 = ssub.s32 1, %s9
  %s12 = scalar_select 0, %s11, %s9
  $region1: #{tpu_custom_call.1} parent=0
    #allocation2 [shape = 'u8[16384]{0}', space=vmem, size = 0x4000, scoped, tag = 'input window, operand 4, single buffered']
    #allocation3 [shape = 's32[1]{0}', space=sflag, size = 0x4, scoped, tag = 'scoped memory for tpu_custom_call.1']
    #allocation4 [shape = 's32[1]{0}', space=sflag, size = 0x4, scoped, tag = 'scoped memory for tpu_custom_call.1']
    #allocation5 [shape = 'u8[16384]{0}', space=vmem, size = 0x4000, scoped, tag = 'output window, operand 0, single buffered']
    %13 = vsyncpa [#allocation3], 0
    %14 = vsyncpa [#allocation4], 0
    // Predicated region
    $region2: #{tpu_custom_call.1} parent=1 // pred_check
      _
    $region3: #{tpu_custom_call.1} parent=1 // pred_check_branch
      %16 = sbr.rel (0) target = $region5
    $region4: #{tpu_custom_call.1} parent=1 // pred_region
      _
    $region5: #{tpu_custom_call.1} parent=1 // pred_fallthru
      _
    // Predicated region
    $region6: #{tpu_custom_call.1} parent=1 // pred_check
      _
    $region7: #{tpu_custom_call.1} parent=1 // pred_check_branch
      %18 = sbr.rel (0) target = $region9
    $region8: #{tpu_custom_call.1} parent=1 // pred_region
      _
    $region9: #{tpu_custom_call.1} parent=1 // pred_fallthru
      _
    // Predicated region
    $region10: #{tpu_custom_call.1} parent=1 // pred_check
      _
    $region11: #{tpu_custom_call.1} parent=1 // pred_check_branch
      %20 = sbr.rel (0) target = $region13
    $region12: #{tpu_custom_call.1} parent=1 // pred_region
      _
    $region13: #{tpu_custom_call.1} parent=1 // pred_fallthru
      _
    // Predicated region
    $region14: #{tpu_custom_call.1} parent=1 // pred_check
      _
    $region15: #{tpu_custom_call.1} parent=1 // pred_check_branch
      %22 = sbr.rel (0) target = $region17
    $region16: #{tpu_custom_call.1} parent=1 // pred_region
      _
    $region17: #{tpu_custom_call.1} parent=1 // pred_fallthru
      _
    // Predicated region
    $region18: #{tpu_custom_call.1} parent=1 // pred_check
      _
    $region19: #{tpu_custom_call.1} parent=1 // pred_check_branch
      %24 = sbr.rel (0) target = $region21
    $region20: #{tpu_custom_call.1} parent=1 // pred_region
      %s26 = ssub.s32 512, 512
      %27 = vsyncadd [#allocation3], %s26
      %s28 = sshll.u32 [#allocation2], 4
      %s29 = int_to_ptr.vmem [resolvable:$true] %s28
      %34 = dma.hbm_to_vmem [thread:$0]  %s4, 512, %s29, [#allocation3], 128, 128, 8
    $region21: #{tpu_custom_call.1} parent=1 // pred_fallthru
      _
    // Predicated region
    $region22: #{tpu_custom_call.1} parent=1 // pred_check
      _
    $region23: #{tpu_custom_call.1} parent=1 // pred_check_branch
      %36 = sbr.rel (0) target = $region25
    $region24: #{tpu_custom_call.1} parent=1 // pred_region
      _
    $region25: #{tpu_custom_call.1} parent=1 // pred_fallthru
      _
    // Predicated region
    $region26: #{tpu_custom_call.1} parent=1 // pred_check
      _
    $region27: #{tpu_custom_call.1} parent=1 // pred_check_branch
      %38 = sbr.rel (0) target = $region29
    $region28: #{tpu_custom_call.1} parent=1 // pred_region
      _
    $region29: #{tpu_custom_call.1} parent=1 // pred_fallthru
      _
    // Predicated region
    $region30: #{tpu_custom_call.1} parent=1 // pred_check
      _
    $region31: #{tpu_custom_call.1} parent=1 // pred_check_branch
      %40 = sbr.rel (0) target = $region33
    $region32: #{tpu_custom_call.1} parent=1 // pred_region
      _
    $region33: #{tpu_custom_call.1} parent=1 // pred_fallthru
      _
    // Predicated region
    $region34: #{tpu_custom_call.1} parent=1 // pred_check
      _
    $region35: #{tpu_custom_call.1} parent=1 // pred_check_branch
      %42 = sbr.rel (0) target = $region37
    $region36: #{tpu_custom_call.1} parent=1 // pred_region
      %43 = dma.done [#allocation3], 512
    $region37: #{tpu_custom_call.1} parent=1 // pred_fallthru
      _
    %v45 = vld [vmem:[%s0] sm:$0xff]
    %v46 = vld [vmem:[%s0 + $0x8] sm:$0xff]
    %s47 = scalar_lea.vmem %s0, 16
    %v48 = vld [vmem:[%s47] sm:$0xff]
    %v49 = vld [vmem:[%s47 + $0x8] sm:$0xff]
    %v50 = vld [vmem:[%s2] sm:$0xf]
    %v51 = vld [vmem:[%s2 + $0x4] sm:$0xf]
    %v52 = vpack.c.bf16 %v45, %v45
    %v53 = vpack.c.bf16 %v46, %v46
    %v54 = vpack.c.bf16 %v48, %v48
    %v55 = vpack.c.bf16 %v49, %v49
    %v56 = vld [vmem:[%s3] sm:$0xff]
    %v57 = vld [vmem:[%s3 + $0x8] sm:$0xff]
    %59 = vset.pattern.permute.xlu0 0
    %60 = vperm.xlu0 %59, %v56
    %v61 = vpop.permute.xlu0 %60
    %64 = vset.pattern.permute.xlu0 0
    %65 = vperm.xlu0 %64, %v57
    %v66 = vpop.permute.xlu0 %65
    %v70 = vunpack.c.l.b16 %v50
    %v71 = vunpack.c.l.b16 %v51
    %v72 = vpack.c.b16 %v71, %v70
    %vm73 = vcmask 64512
    %v75 = vsel %vm73, %v72, 0
    %vm77 = vcmask 1043456
    %v79 = vsel %vm77, %v52, 0
    %v82 = vsel %vm77, %v53, 0
    %v85 = vsel %vm77, %v54, 0
    %v88 = vsel %vm77, %v55, 0
    %90 = vmatprep.subr.bf16.mxu0 %v82
    %91 = vmatpush1.bf16.msra.mxu0 %v79
    %92 = vmatprep.subr.bf16.mxu0 0
    %93 = vmatpush1.bf16.msra.mxu0 0
    %94 = vmatprep.subr.bf16.mxu0 0
    %95 = vmatpush1.bf16.msra.mxu0 0
    %96 = vmatprep.subr.bf16.mxu0 0
    %97 = vmatpush1.bf16.msra.mxu0 0
    %98 = vmatprep.subr.bf16.mxu0 0
    %99 = vmatpush1.bf16.msra.mxu0 0
    %100 = vmatprep.subr.bf16.mxu0 0
    %101 = vmatpush1.bf16.msra.mxu0 0
    %102 = vmatprep.subr.bf16.mxu0 0
    %103 = vmatpush1.bf16.msra.mxu0 0
    %104 = vmatprep.subr.bf16.mxu0 0
    %105 = vmatpush1.bf16.msra.mxu0 0
    %106 = vmatprep.subr.bf16.mxu0 0
    %107 = vmatpush1.bf16.msra.mxu0 0
    %108 = vmatprep.subr.bf16.mxu0 0
    %109 = vmatpush1.bf16.msra.mxu0 0
    %110 = vmatprep.subr.bf16.mxu0 0
    %111 = vmatpush1.bf16.msra.mxu0 0
    %112 = vmatprep.subr.bf16.mxu0 0
    %113 = vmatpush1.bf16.msra.mxu0 0
    %114 = vmatprep.subr.bf16.mxu0 0
    %115 = vmatpush1.bf16.msra.mxu0 0
    %116 = vmatprep.subr.bf16.mxu0 0
    %117 = vmatpush1.bf16.msra.mxu0 0
    %118 = vmatprep.subr.bf16.mxu0 0
    %119 = vmatpush1.bf16.msra.mxu0 0
    %120 = vmatprep.subr.bf16.mxu0 0
    %121 = vmatpush1.bf16.msra.mxu0 0
    %122 = vmatprep.mubr.bf16.mxu0 0
    %123 = vmatmul.mubr.bf16.gmra.mrb[0].mxu0 %v75
    %v124 = vpop.f32.mrb[0].mxu0
    %v125 = vadd.f32 %v61, %v124
    %v126 = vpop.f32.mrb[0].mxu0
    %v127 = vadd.f32 %v61, %v126
    %v128 = vpop.f32.mrb[0].mxu0
    %v129 = vadd.f32 %v66, %v128
    %v130 = vpop.f32.mrb[0].mxu0
    %v131 = vadd.f32 %v66, %v130
    %132 = vdwg.mxu0
    %133 = vmatprep.subr.bf16.mxu0 %v88
    %134 = vmatpush1.bf16.msra.mxu0 %v85
    %135 = vmatprep.subr.bf16.mxu0 0
    %136 = vmatpush1.bf16.msra.mxu0 0
    %137 = vmatprep.subr.bf16.mxu0 0
    %138 = vmatpush1.bf16.msra.mxu0 0
    %139 = vmatprep.subr.bf16.mxu0 0
    %140 = vmatpush1.bf16.msra.mxu0 0
    %141 = vmatprep.subr.bf16.mxu0 0
    %142 = vmatpush1.bf16.msra.mxu0 0
    %143 = vmatprep.subr.bf16.mxu0 0
    %144 = vmatpush1.bf16.msra.mxu0 0
    %145 = vmatprep.subr.bf16.mxu0 0
    %146 = vmatpush1.bf16.msra.mxu0 0
    %147 = vmatprep.subr.bf16.mxu0 0
    %148 = vmatpush1.bf16.msra.mxu0 0
    %149 = vmatprep.subr.bf16.mxu0 0
    %150 = vmatpush1.bf16.msra.mxu0 0
    %151 = vmatprep.subr.bf16.mxu0 0
    %152 = vmatpush1.bf16.msra.mxu0 0
    %153 = vmatprep.subr.bf16.mxu0 0
    %154 = vmatpush1.bf16.msra.mxu0 0
    %155 = vmatprep.subr.bf16.mxu0 0
    %156 = vmatpush1.bf16.msra.mxu0 0
    %157 = vmatprep.subr.bf16.mxu0 0
    %158 = vmatpush1.bf16.msra.mxu0 0
    %159 = vmatprep.subr.bf16.mxu0 0
    %160 = vmatpush1.bf16.msra.mxu0 0
    %161 = vmatprep.subr.bf16.mxu0 0
    %162 = vmatpush1.bf16.msra.mxu0 0
    %163 = vmatprep.subr.bf16.mxu0 0
    %164 = vmatpush1.bf16.msra.mxu0 0
    %165 = vmatprep.mubr.bf16.mxu0 0
    %166 = vmatmul.mubr.bf16.gmra.mrb[0].mxu0 %v75
    %v167 = vpop.f32.mrb[0].mxu0
    %v168 = vadd.f32 %v61, %v167
    %v169 = vpop.f32.mrb[0].mxu0
    %v170 = vadd.f32 %v61, %v169
    %v171 = vpop.f32.mrb[0].mxu0
    %v172 = vadd.f32 %v66, %v171
    %v173 = vpop.f32.mrb[0].mxu0
    %v174 = vadd.f32 %v66, %v173
    %175 = vdwg.mxu0
    %v176 = vmax.f32 %v125, 0.0
    %v177 = vmax.f32 %v127, 0.0
    %v178 = vmax.f32 %v168, 0.0
    %v179 = vmax.f32 %v170, 0.0
    %v180 = vmax.f32 %v129, 0.0
    %v181 = vmax.f32 %v131, 0.0
    %v182 = vmax.f32 %v172, 0.0
    %v183 = vmax.f32 %v174, 0.0
    %184 = vrot.lane.b32.xlu0 %v176, 17
    %v185 = vpop.permute.xlu0 %184
    %186 = vrot.lane.b32.xlu0 %v180, 17
    %v187 = vpop.permute.xlu0 %186
    %188 = vrot.lane.b32.xlu0 %v177, 17
    %v189 = vpop.permute.xlu0 %188
    %190 = vrot.lane.b32.xlu0 %v181, 17
    %v191 = vpop.permute.xlu0 %190
    %192 = vrot.lane.b32.xlu0 %v178, 17
    %v193 = vpop.permute.xlu0 %192
    %194 = vrot.lane.b32.xlu0 %v182, 17
    %v195 = vpop.permute.xlu0 %194
    %196 = vrot.lane.b32.xlu0 %v179, 17
    %v197 = vpop.permute.xlu0 %196
    %198 = vrot.lane.b32.xlu0 %v183, 17
    %v199 = vpop.permute.xlu0 %198
    %v200 = vlaneseq
    %v201 = vand.u32 %v200, 127
    %vm202 = vcmp.lt.s32.totalorder %v201, 17
    %v203 = vsel %vm202, %v193, %v197
    %v204 = vsel %vm202, %v195, %v199
    %v205 = vsel %vm202, %v189, %v193
    %v206 = vsel %vm202, %v191, %v195
    %v207 = vsel %vm202, %v185, %v189
    %v208 = vsel %vm202, %v187, %v191
    %v209 = vsel %vm202, %v197, %v185
    %v210 = vsel %vm202, %v199, %v187
    %v211 = vld [vmem:[%s1] sm:$0xf]
    %v213 = vlaneseq
    %v214 = vshrl.u32 %v213, 7
    %v215 = vsub.s32 0, %v214
    %v216 = vrot.slane %v211, %v215
    %v217 = vlaneseq
    %v218 = vshrl.u32 %v217, 7
    %v219 = vsub.s32 1, %v218
    %v220 = vrot.slane %v211, %v219
    %v221 = vlaneseq
    %v222 = vshrl.u32 %v221, 7
    %v223 = vsub.s32 2, %v222
    %v224 = vrot.slane %v211, %v223
    %v225 = vlaneseq
    %v226 = vshrl.u32 %v225, 7
    %v227 = vsub.s32 3, %v226
    %v228 = vrot.slane %v211, %v227
    %v233 = vmul.f32 %v209, %v216
    %v234 = vmul.f32 %v207, %v220
    %v235 = vmul.f32 %v205, %v224
    %v236 = vmul.f32 %v203, %v228
    %v237 = vmul.f32 %v210, %v216
    %v238 = vmul.f32 %v208, %v220
    %v239 = vmul.f32 %v206, %v224
    %v240 = vmul.f32 %v204, %v228
    %v241 = vpack.c.bf16 %v237, %v233
    %v242 = vpack.c.bf16 %v238, %v234
    %v243 = vpack.c.bf16 %v239, %v235
    %v244 = vpack.c.bf16 %v240, %v236
    %245 = vrot.lane.b32.xlu0 %v176, 16
    %v246 = vpop.permute.xlu0 %245
    %247 = vrot.lane.b32.xlu0 %v180, 16
    %v248 = vpop.permute.xlu0 %247
    %249 = vrot.lane.b32.xlu0 %v177, 16
    %v250 = vpop.permute.xlu0 %249
    %251 = vrot.lane.b32.xlu0 %v181, 16
    %v252 = vpop.permute.xlu0 %251
    %253 = vrot.lane.b32.xlu0 %v178, 16
    %v254 = vpop.permute.xlu0 %253
    %255 = vrot.lane.b32.xlu0 %v182, 16
    %v256 = vpop.permute.xlu0 %255
    %257 = vrot.lane.b32.xlu0 %v179, 16
    %v258 = vpop.permute.xlu0 %257
    %259 = vrot.lane.b32.xlu0 %v183, 16
    %v260 = vpop.permute.xlu0 %259
    %vm261 = vcmp.lt.s32.totalorder %v201, 16
    %v262 = vsel %vm261, %v254, %v258
    %v263 = vsel %vm261, %v256, %v260
    %v264 = vsel %vm261, %v250, %v254
    %v265 = vsel %vm261, %v252, %v256
    %v266 = vsel %vm261, %v246, %v250
    %v267 = vsel %vm261, %v248, %v252
    %v268 = vsel %vm261, %v258, %v246
    %v269 = vsel %vm261, %v260, %v248
    %s270 = scalar_lea.vmem %s1, 4
    %v271 = vld [vmem:[%s270] sm:$0xf]
    %v273 = vlaneseq
    %v274 = vshrl.u32 %v273, 7
    %v275 = vsub.s32 0, %v274
    %v276 = vrot.slane %v271, %v275
    %v277 = vlaneseq
    %v278 = vshrl.u32 %v277, 7
    %v279 = vsub.s32 1, %v278
    %v280 = vrot.slane %v271, %v279
    %v281 = vlaneseq
    %v282 = vshrl.u32 %v281, 7
    %v283 = vsub.s32 2, %v282
    %v284 = vrot.slane %v271, %v283
    %v285 = vlaneseq
    %v286 = vshrl.u32 %v285, 7
    %v287 = vsub.s32 3, %v286
    %v288 = vrot.slane %v271, %v287
    %v293 = vmul.f32 %v268, %v276
    %v294 = vmul.f32 %v266, %v280
    %v295 = vmul.f32 %v264, %v284
    %v296 = vmul.f32 %v262, %v288
    %v297 = vmul.f32 %v269, %v276
    %v298 = vmul.f32 %v267, %v280
    %v299 = vmul.f32 %v265, %v284
    %v300 = vmul.f32 %v263, %v288
    %v301 = vpack.c.bf16 %v297, %v293
    %v302 = vpack.c.bf16 %v298, %v294
    %v303 = vpack.c.bf16 %v299, %v295
    %v304 = vpack.c.bf16 %v300, %v296
    %305 = vrot.lane.b32.xlu0 %v176, 15
    %v306 = vpop.permute.xlu0 %305
    %307 = vrot.lane.b32.xlu0 %v180, 15
    %v308 = vpop.permute.xlu0 %307
    %309 = vrot.lane.b32.xlu0 %v177, 15
    %v310 = vpop.permute.xlu0 %309
    %311 = vrot.lane.b32.xlu0 %v181, 15
    %v312 = vpop.permute.xlu0 %311
    %313 = vrot.lane.b32.xlu0 %v178, 15
    %v314 = vpop.permute.xlu0 %313
    %315 = vrot.lane.b32.xlu0 %v182, 15
    %v316 = vpop.permute.xlu0 %315
    %317 = vrot.lane.b32.xlu0 %v179, 15
    %v318 = vpop.permute.xlu0 %317
    %319 = vrot.lane.b32.xlu0 %v183, 15
    %v320 = vpop.permute.xlu0 %319
    %vm321 = vcmp.lt.s32.totalorder %v201, 15
    %v322 = vsel %vm321, %v314, %v318
    %v323 = vsel %vm321, %v316, %v320
    %v324 = vsel %vm321, %v310, %v314
    %v325 = vsel %vm321, %v312, %v316
    %v326 = vsel %vm321, %v306, %v310
    %v327 = vsel %vm321, %v308, %v312
    %v328 = vsel %vm321, %v318, %v306
    %v329 = vsel %vm321, %v320, %v308
    %s330 = scalar_lea.vmem %s1, 8
    %v331 = vld [vmem:[%s330] sm:$0xf]
    %v333 = vlaneseq
    %v334 = vshrl.u32 %v333, 7
    %v335 = vsub.s32 0, %v334
    %v336 = vrot.slane %v331, %v335
    %v337 = vlaneseq
    %v338 = vshrl.u32 %v337, 7
    %v339 = vsub.s32 1, %v338
    %v340 = vrot.slane %v331, %v339
    %v341 = vlaneseq
    %v342 = vshrl.u32 %v341, 7
    %v343 = vsub.s32 2, %v342
    %v344 = vrot.slane %v331, %v343
    %v345 = vlaneseq
    %v346 = vshrl.u32 %v345, 7
    %v347 = vsub.s32 3, %v346
    %v348 = vrot.slane %v331, %v347
    %v353 = vmul.f32 %v328, %v336
    %v354 = vmul.f32 %v326, %v340
    %v355 = vmul.f32 %v324, %v344
    %v356 = vmul.f32 %v322, %v348
    %v357 = vmul.f32 %v329, %v336
    %v358 = vmul.f32 %v327, %v340
    %v359 = vmul.f32 %v325, %v344
    %v360 = vmul.f32 %v323, %v348
    %v361 = vpack.c.bf16 %v357, %v353
    %v362 = vpack.c.bf16 %v358, %v354
    %v363 = vpack.c.bf16 %v359, %v355
    %v364 = vpack.c.bf16 %v360, %v356
    %365 = vrot.lane.b32.xlu0 %v176, 1
    %v366 = vpop.permute.xlu0 %365
    %367 = vrot.lane.b32.xlu0 %v180, 1
    %v368 = vpop.permute.xlu0 %367
    %369 = vrot.lane.b32.xlu0 %v177, 1
    %v370 = vpop.permute.xlu0 %369
    %371 = vrot.lane.b32.xlu0 %v181, 1
    %v372 = vpop.permute.xlu0 %371
    %373 = vrot.lane.b32.xlu0 %v178, 1
    %v374 = vpop.permute.xlu0 %373
    %375 = vrot.lane.b32.xlu0 %v182, 1
    %v376 = vpop.permute.xlu0 %375
    %377 = vrot.lane.b32.xlu0 %v179, 1
    %v378 = vpop.permute.xlu0 %377
    %379 = vrot.lane.b32.xlu0 %v183, 1
    %v380 = vpop.permute.xlu0 %379
    %vm381 = vcmp.lt.s32.totalorder %v201, 1
    %v382 = vsel %vm381, %v374, %v378
    %v383 = vsel %vm381, %v376, %v380
    %v384 = vsel %vm381, %v370, %v374
    %v385 = vsel %vm381, %v372, %v376
    %v386 = vsel %vm381, %v366, %v370
    %v387 = vsel %vm381, %v368, %v372
    %v388 = vsel %vm381, %v378, %v366
    %v389 = vsel %vm381, %v380, %v368
    %s390 = scalar_lea.vmem %s1, 12
    %v391 = vld [vmem:[%s390] sm:$0xf]
    %v393 = vlaneseq
    %v394 = vshrl.u32 %v393, 7
    %v395 = vsub.s32 0, %v394
    %v396 = vrot.slane %v391, %v395
    %v397 = vlaneseq
    %v398 = vshrl.u32 %v397, 7
    %v399 = vsub.s32 1, %v398
    %v400 = vrot.slane %v391, %v399
    %v401 = vlaneseq
    %v402 = vshrl.u32 %v401, 7
    %v403 = vsub.s32 2, %v402
    %v404 = vrot.slane %v391, %v403
    %v405 = vlaneseq
    %v406 = vshrl.u32 %v405, 7
    %v407 = vsub.s32 3, %v406
    %v408 = vrot.slane %v391, %v407
    %v413 = vmul.f32 %v388, %v396
    %v414 = vmul.f32 %v386, %v400
    %v415 = vmul.f32 %v384, %v404
    %v416 = vmul.f32 %v382, %v408
    %v417 = vmul.f32 %v389, %v396
    %v418 = vmul.f32 %v387, %v400
    %v419 = vmul.f32 %v385, %v404
    %v420 = vmul.f32 %v383, %v408
    %v421 = vpack.c.bf16 %v417, %v413
    %v422 = vpack.c.bf16 %v418, %v414
    %v423 = vpack.c.bf16 %v419, %v415
    %v424 = vpack.c.bf16 %v420, %v416
    %s425 = scalar_lea.vmem %s1, 16
    %v426 = vld [vmem:[%s425] sm:$0xf]
    %v428 = vlaneseq
    %v429 = vshrl.u32 %v428, 7
    %v430 = vsub.s32 0, %v429
    %v431 = vrot.slane %v426, %v430
    %v432 = vlaneseq
    %v433 = vshrl.u32 %v432, 7
    %v434 = vsub.s32 1, %v433
    %v435 = vrot.slane %v426, %v434
    %v436 = vlaneseq
    %v437 = vshrl.u32 %v436, 7
    %v438 = vsub.s32 2, %v437
    %v439 = vrot.slane %v426, %v438
    %v440 = vlaneseq
    %v441 = vshrl.u32 %v440, 7
    %v442 = vsub.s32 3, %v441
    %v443 = vrot.slane %v426, %v442
    %v448 = vmul.f32 %v176, %v431
    %v449 = vmul.f32 %v177, %v435
    %v450 = vmul.f32 %v178, %v439
    %v451 = vmul.f32 %v179, %v443
    %v452 = vmul.f32 %v180, %v431
    %v453 = vmul.f32 %v181, %v435
    %v454 = vmul.f32 %v182, %v439
    %v455 = vmul.f32 %v183, %v443
    %v456 = vpack.c.bf16 %v452, %v448
    %v457 = vpack.c.bf16 %v453, %v449
    %v458 = vpack.c.bf16 %v454, %v450
    %v459 = vpack.c.bf16 %v455, %v451
    %460 = vrot.lane.b32.xlu0 %v176, 127
    %v461 = vpop.permute.xlu0 %460
    %462 = vrot.lane.b32.xlu0 %v180, 127
    %v463 = vpop.permute.xlu0 %462
    %464 = vrot.lane.b32.xlu0 %v177, 127
    %v465 = vpop.permute.xlu0 %464
    %466 = vrot.lane.b32.xlu0 %v181, 127
    %v467 = vpop.permute.xlu0 %466
    %468 = vrot.lane.b32.xlu0 %v178, 127
    %v469 = vpop.permute.xlu0 %468
    %470 = vrot.lane.b32.xlu0 %v182, 127
    %v471 = vpop.permute.xlu0 %470
    %472 = vrot.lane.b32.xlu0 %v179, 127
    %v473 = vpop.permute.xlu0 %472
    %474 = vrot.lane.b32.xlu0 %v183, 127
    %v475 = vpop.permute.xlu0 %474
    %vm476 = vcmp.lt.s32.totalorder %v201, 127
    %v477 = vsel %vm476, %v469, %v473
    %v478 = vsel %vm476, %v471, %v475
    %v479 = vsel %vm476, %v465, %v469
    %v480 = vsel %vm476, %v467, %v471
    %v481 = vsel %vm476, %v461, %v465
    %v482 = vsel %vm476, %v463, %v467
    %v483 = vsel %vm476, %v473, %v461
    %v484 = vsel %vm476, %v475, %v463
    %s485 = scalar_lea.vmem %s1, 20
    %v486 = vld [vmem:[%s485] sm:$0xf]
    %v488 = vlaneseq
    %v489 = vshrl.u32 %v488, 7
    %v490 = vsub.s32 0, %v489
    %v491 = vrot.slane %v486, %v490
    %v492 = vlaneseq
    %v493 = vshrl.u32 %v492, 7
    %v494 = vsub.s32 1, %v493
    %v495 = vrot.slane %v486, %v494
    %v496 = vlaneseq
    %v497 = vshrl.u32 %v496, 7
    %v498 = vsub.s32 2, %v497
    %v499 = vrot.slane %v486, %v498
    %v500 = vlaneseq
    %v501 = vshrl.u32 %v500, 7
    %v502 = vsub.s32 3, %v501
    %v503 = vrot.slane %v486, %v502
    %v508 = vmul.f32 %v481, %v491
    %v509 = vmul.f32 %v479, %v495
    %v510 = vmul.f32 %v477, %v499
    %v511 = vmul.f32 %v483, %v503
    %v512 = vmul.f32 %v482, %v491
    %v513 = vmul.f32 %v480, %v495
    %v514 = vmul.f32 %v478, %v499
    %v515 = vmul.f32 %v484, %v503
    %v516 = vpack.c.bf16 %v512, %v508
    %v517 = vpack.c.bf16 %v513, %v509
    %v518 = vpack.c.bf16 %v514, %v510
    %v519 = vpack.c.bf16 %v515, %v511
    %520 = vrot.lane.b32.xlu0 %v176, 113
    %v521 = vpop.permute.xlu0 %520
    %522 = vrot.lane.b32.xlu0 %v180, 113
    %v523 = vpop.permute.xlu0 %522
    %524 = vrot.lane.b32.xlu0 %v177, 113
    %v525 = vpop.permute.xlu0 %524
    %526 = vrot.lane.b32.xlu0 %v181, 113
    %v527 = vpop.permute.xlu0 %526
    %528 = vrot.lane.b32.xlu0 %v178, 113
    %v529 = vpop.permute.xlu0 %528
    %530 = vrot.lane.b32.xlu0 %v182, 113
    %v531 = vpop.permute.xlu0 %530
    %532 = vrot.lane.b32.xlu0 %v179, 113
    %v533 = vpop.permute.xlu0 %532
    %534 = vrot.lane.b32.xlu0 %v183, 113
    %v535 = vpop.permute.xlu0 %534
    %vm536 = vcmp.lt.s32.totalorder %v201, 113
    %v537 = vsel %vm536, %v529, %v533
    %v538 = vsel %vm536, %v531, %v535
    %v539 = vsel %vm536, %v525, %v529
    %v540 = vsel %vm536, %v527, %v531
    %v541 = vsel %vm536, %v521, %v525
    %v542 = vsel %vm536, %v523, %v527
    %v543 = vsel %vm536, %v533, %v521
    %v544 = vsel %vm536, %v535, %v523
    %s545 = scalar_lea.vmem %s1, 24
    %v546 = vld [vmem:[%s545] sm:$0xf]
    %v548 = vlaneseq
    %v549 = vshrl.u32 %v548, 7
    %v550 = vsub.s32 0, %v549
    %v551 = vrot.slane %v546, %v550
    %v552 = vlaneseq
    %v553 = vshrl.u32 %v552, 7
    %v554 = vsub.s32 1, %v553
    %v555 = vrot.slane %v546, %v554
    %v556 = vlaneseq
    %v557 = vshrl.u32 %v556, 7
    %v558 = vsub.s32 2, %v557
    %v559 = vrot.slane %v546, %v558
    %v560 = vlaneseq
    %v561 = vshrl.u32 %v560, 7
    %v562 = vsub.s32 3, %v561
    %v563 = vrot.slane %v546, %v562
    %v568 = vmul.f32 %v541, %v551
    %v569 = vmul.f32 %v539, %v555
    %v570 = vmul.f32 %v537, %v559
    %v571 = vmul.f32 %v543, %v563
    %v572 = vmul.f32 %v542, %v551
    %v573 = vmul.f32 %v540, %v555
    %v574 = vmul.f32 %v538, %v559
    %v575 = vmul.f32 %v544, %v563
    %v576 = vpack.c.bf16 %v572, %v568
    %v577 = vpack.c.bf16 %v573, %v569
    %v578 = vpack.c.bf16 %v574, %v570
    %v579 = vpack.c.bf16 %v575, %v571
    %580 = vrot.lane.b32.xlu0 %v176, 112
    %v581 = vpop.permute.xlu0 %580
    %582 = vrot.lane.b32.xlu0 %v180, 112
    %v583 = vpop.permute.xlu0 %582
    %584 = vrot.lane.b32.xlu0 %v177, 112
    %v585 = vpop.permute.xlu0 %584
    %586 = vrot.lane.b32.xlu0 %v181, 112
    %v587 = vpop.permute.xlu0 %586
    %588 = vrot.lane.b32.xlu0 %v178, 112
    %v589 = vpop.permute.xlu0 %588
    %590 = vrot.lane.b32.xlu0 %v182, 112
    %v591 = vpop.permute.xlu0 %590
    %592 = vrot.lane.b32.xlu0 %v179, 112
    %v593 = vpop.permute.xlu0 %592
    %594 = vrot.lane.b32.xlu0 %v183, 112
    %v595 = vpop.permute.xlu0 %594
    %vm596 = vcmp.lt.s32.totalorder %v201, 112
    %v597 = vsel %vm596, %v589, %v593
    %v598 = vsel %vm596, %v591, %v595
    %v599 = vsel %vm596, %v585, %v589
    %v600 = vsel %vm596, %v587, %v591
    %v601 = vsel %vm596, %v581, %v585
    %v602 = vsel %vm596, %v583, %v587
    %v603 = vsel %vm596, %v593, %v581
    %v604 = vsel %vm596, %v595, %v583
    %s605 = scalar_lea.vmem %s1, 28
    %v606 = vld [vmem:[%s605] sm:$0xf]
    %v608 = vlaneseq
    %v609 = vshrl.u32 %v608, 7
    %v610 = vsub.s32 0, %v609
    %v611 = vrot.slane %v606, %v610
    %v612 = vlaneseq
    %v613 = vshrl.u32 %v612, 7
    %v614 = vsub.s32 1, %v613
    %v615 = vrot.slane %v606, %v614
    %v616 = vlaneseq
    %v617 = vshrl.u32 %v616, 7
    %v618 = vsub.s32 2, %v617
    %v619 = vrot.slane %v606, %v618
    %v620 = vlaneseq
    %v621 = vshrl.u32 %v620, 7
    %v622 = vsub.s32 3, %v621
    %v623 = vrot.slane %v606, %v622
    %v628 = vmul.f32 %v601, %v611
    %v629 = vmul.f32 %v599, %v615
    %v630 = vmul.f32 %v597, %v619
    %v631 = vmul.f32 %v603, %v623
    %v632 = vmul.f32 %v602, %v611
    %v633 = vmul.f32 %v600, %v615
    %v634 = vmul.f32 %v598, %v619
    %v635 = vmul.f32 %v604, %v623
    %v636 = vpack.c.bf16 %v632, %v628
    %v637 = vpack.c.bf16 %v633, %v629
    %v638 = vpack.c.bf16 %v634, %v630
    %v639 = vpack.c.bf16 %v635, %v631
    %640 = vrot.lane.b32.xlu0 %v176, 111
    %v641 = vpop.permute.xlu0 %640
    %642 = vrot.lane.b32.xlu0 %v180, 111
    %v643 = vpop.permute.xlu0 %642
    %644 = vrot.lane.b32.xlu0 %v177, 111
    %v645 = vpop.permute.xlu0 %644
    %646 = vrot.lane.b32.xlu0 %v181, 111
    %v647 = vpop.permute.xlu0 %646
    %648 = vrot.lane.b32.xlu0 %v178, 111
    %v649 = vpop.permute.xlu0 %648
    %650 = vrot.lane.b32.xlu0 %v182, 111
    %v651 = vpop.permute.xlu0 %650
    %652 = vrot.lane.b32.xlu0 %v179, 111
    %v653 = vpop.permute.xlu0 %652
    %654 = vrot.lane.b32.xlu0 %v183, 111
    %v655 = vpop.permute.xlu0 %654
    %vm656 = vcmp.lt.s32.totalorder %v201, 111
    %v657 = vsel %vm656, %v649, %v653
    %v658 = vsel %vm656, %v651, %v655
    %v659 = vsel %vm656, %v645, %v649
    %v660 = vsel %vm656, %v647, %v651
    %v661 = vsel %vm656, %v641, %v645
    %v662 = vsel %vm656, %v643, %v647
    %v663 = vsel %vm656, %v653, %v641
    %v664 = vsel %vm656, %v655, %v643
    %s665 = scalar_lea.vmem %s1, 32
    %v666 = vld [vmem:[%s665] sm:$0xf]
    %v668 = vlaneseq
    %v669 = vshrl.u32 %v668, 7
    %v670 = vsub.s32 0, %v669
    %v671 = vrot.slane %v666, %v670
    %v672 = vlaneseq
    %v673 = vshrl.u32 %v672, 7
    %v674 = vsub.s32 1, %v673
    %v675 = vrot.slane %v666, %v674
    %v676 = vlaneseq
    %v677 = vshrl.u32 %v676, 7
    %v678 = vsub.s32 2, %v677
    %v679 = vrot.slane %v666, %v678
    %v680 = vlaneseq
    %v681 = vshrl.u32 %v680, 7
    %v682 = vsub.s32 3, %v681
    %v683 = vrot.slane %v666, %v682
    %v688 = vmul.f32 %v661, %v671
    %v689 = vmul.f32 %v659, %v675
    %v690 = vmul.f32 %v657, %v679
    %v691 = vmul.f32 %v663, %v683
    %v692 = vmul.f32 %v662, %v671
    %v693 = vmul.f32 %v660, %v675
    %v694 = vmul.f32 %v658, %v679
    %v695 = vmul.f32 %v664, %v683
    %v696 = vpack.c.bf16 %v692, %v688
    %v697 = vpack.c.bf16 %v693, %v689
    %v698 = vpack.c.bf16 %v694, %v690
    %v699 = vpack.c.bf16 %v695, %v691
    %v700 = vld [vmem:[#allocation2] sm:$0xff]
    %v701 = vld [vmem:[#allocation2 + $0x8] sm:$0xff]
    %v702 = vld [vmem:[#allocation2 + $0x10] sm:$0xff]
    %v703 = vld [vmem:[#allocation2 + $0x18] sm:$0xff]
    %v704 = vld [vmem:[%s5] sm:$0xff]
    %v705 = vld [vmem:[%s5 + $0x8] sm:$0xff]
    %v706 = vld [vmem:[%s5 + $0x10] sm:$0xff]
    %v707 = vld [vmem:[%s5 + $0x18] sm:$0xff]
    %709 = vset.pattern.permute.xlu0 0
    %710 = vperm.xlu0 %709, %v704
    %v711 = vpop.permute.xlu0 %710
    %714 = vset.pattern.permute.xlu0 0
    %715 = vperm.xlu0 %714, %v705
    %v716 = vpop.permute.xlu0 %715
    %719 = vset.pattern.permute.xlu0 0
    %720 = vperm.xlu0 %719, %v706
    %v721 = vpop.permute.xlu0 %720
    %724 = vset.pattern.permute.xlu0 0
    %725 = vperm.xlu0 %724, %v707
    %v726 = vpop.permute.xlu0 %725
    %v732 = vunpack.c.l.b16 %v700
    %v733 = vunpack.c.h.b16 %v700
    %v734 = vunpack.c.l.b16 %v701
    %v735 = vunpack.c.h.b16 %v701
    %v736 = vunpack.c.l.b16 %v702
    %v737 = vunpack.c.h.b16 %v702
    %v738 = vunpack.c.l.b16 %v703
    %v739 = vunpack.c.h.b16 %v703
    %v740 = vpack.c.b16 %v734, %v732
    %v741 = vpack.c.b16 %v735, %v733
    %v742 = vpack.c.b16 %v738, %v736
    %v743 = vpack.c.b16 %v739, %v737
    %vm746 = vcmask 130048
    %v748 = vsel %vm746, %v741, 0
    %v751 = vsel %vm746, %v743, 0
    %753 = vmatprep.subr.bf16.mxu0 %v242
    %754 = vmatpush1.bf16.msra.mxu0 %v241
    %755 = vmatprep.subr.bf16.mxu0 %v302
    %756 = vmatpush1.bf16.msra.mxu0 %v301
    %757 = vmatprep.subr.bf16.mxu0 %v362
    %758 = vmatpush1.bf16.msra.mxu0 %v361
    %759 = vmatprep.subr.bf16.mxu0 %v422
    %760 = vmatpush1.bf16.msra.mxu0 %v421
    %761 = vmatprep.subr.bf16.mxu0 %v457
    %762 = vmatpush1.bf16.msra.mxu0 %v456
    %763 = vmatprep.subr.bf16.mxu0 %v517
    %764 = vmatpush1.bf16.msra.mxu0 %v516
    %765 = vmatprep.subr.bf16.mxu0 %v577
    %766 = vmatpush1.bf16.msra.mxu0 %v576
    %767 = vmatprep.subr.bf16.mxu0 %v637
    %768 = vmatpush1.bf16.msra.mxu0 %v636
    %769 = vmatprep.subr.bf16.mxu0 %v697
    %770 = vmatpush1.bf16.msra.mxu0 %v696
    %771 = vmatprep.subr.bf16.mxu0 0
    %772 = vmatpush1.bf16.msra.mxu0 0
    %773 = vmatprep.subr.bf16.mxu0 0
    %774 = vmatpush1.bf16.msra.mxu0 0
    %775 = vmatprep.subr.bf16.mxu0 0
    %776 = vmatpush1.bf16.msra.mxu0 0
    %777 = vmatprep.subr.bf16.mxu0 0
    %778 = vmatpush1.bf16.msra.mxu0 0
    %779 = vmatprep.subr.bf16.mxu0 0
    %780 = vmatpush1.bf16.msra.mxu0 0
    %781 = vmatprep.subr.bf16.mxu0 0
    %782 = vmatpush1.bf16.msra.mxu0 0
    %783 = vmatprep.subr.bf16.mxu0 0
    %784 = vmatpush1.bf16.msra.mxu0 0
    %785 = vmatprep.mubr.bf16.mxu0 %v748
    %786 = vmatmul.mubr.bf16.gmra.mrb[0].mxu0 %v740
    %v787 = vpop.f32.mrb[0].mxu0
    %v788 = vadd.f32 %v711, %v787
    %v789 = vpop.f32.mrb[0].mxu0
    %v790 = vadd.f32 %v711, %v789
    %v791 = vpop.f32.mrb[0].mxu0
    %v792 = vadd.f32 %v716, %v791
    %v793 = vpop.f32.mrb[0].mxu0
    %v794 = vadd.f32 %v716, %v793
    %795 = vmatprep.mubr.bf16.mxu0 %v751
    %796 = vmatmul.mubr.bf16.gmra.mrb[0].mxu0 %v742
    %v797 = vpop.f32.mrb[0].mxu0
    %v798 = vadd.f32 %v721, %v797
    %v799 = vpop.f32.mrb[0].mxu0
    %v800 = vadd.f32 %v721, %v799
    %v801 = vpop.f32.mrb[0].mxu0
    %v802 = vadd.f32 %v726, %v801
    %v803 = vpop.f32.mrb[0].mxu0
    %v804 = vadd.f32 %v726, %v803
    %805 = vdwg.mxu0
    %806 = vmatprep.subr.bf16.mxu0 %v244
    %807 = vmatpush1.bf16.msra.mxu0 %v243
    %808 = vmatprep.subr.bf16.mxu0 %v304
    %809 = vmatpush1.bf16.msra.mxu0 %v303
    %810 = vmatprep.subr.bf16.mxu0 %v364
    %811 = vmatpush1.bf16.msra.mxu0 %v363
    %812 = vmatprep.subr.bf16.mxu0 %v424
    %813 = vmatpush1.bf16.msra.mxu0 %v423
    %814 = vmatprep.subr.bf16.mxu0 %v459
    %815 = vmatpush1.bf16.msra.mxu0 %v458
    %816 = vmatprep.subr.bf16.mxu0 %v519
    %817 = vmatpush1.bf16.msra.mxu0 %v518
    %818 = vmatprep.subr.bf16.mxu0 %v579
    %819 = vmatpush1.bf16.msra.mxu0 %v578
    %820 = vmatprep.subr.bf16.mxu0 %v639
    %821 = vmatpush1.bf16.msra.mxu0 %v638
    %822 = vmatprep.subr.bf16.mxu0 %v699
    %823 = vmatpush1.bf16.msra.mxu0 %v698
    %824 = vmatprep.subr.bf16.mxu0 0
    %825 = vmatpush1.bf16.msra.mxu0 0
    %826 = vmatprep.subr.bf16.mxu0 0
    %827 = vmatpush1.bf16.msra.mxu0 0
    %828 = vmatprep.subr.bf16.mxu0 0
    %829 = vmatpush1.bf16.msra.mxu0 0
    %830 = vmatprep.subr.bf16.mxu0 0
    %831 = vmatpush1.bf16.msra.mxu0 0
    %832 = vmatprep.subr.bf16.mxu0 0
    %833 = vmatpush1.bf16.msra.mxu0 0
    %834 = vmatprep.subr.bf16.mxu0 0
    %835 = vmatpush1.bf16.msra.mxu0 0
    %836 = vmatprep.subr.bf16.mxu0 0
    %837 = vmatpush1.bf16.msra.mxu0 0
    %838 = vmatprep.mubr.bf16.mxu0 %v748
    %839 = vmatmul.mubr.bf16.gmra.mrb[0].mxu0 %v740
    %v840 = vpop.f32.mrb[0].mxu0
    %v841 = vadd.f32 %v711, %v840
    %v842 = vpop.f32.mrb[0].mxu0
    %v843 = vadd.f32 %v711, %v842
    %v844 = vpop.f32.mrb[0].mxu0
    %v845 = vadd.f32 %v716, %v844
    %v846 = vpop.f32.mrb[0].mxu0
    %v847 = vadd.f32 %v716, %v846
    %848 = vmatprep.mubr.bf16.mxu0 %v751
    %849 = vmatmul.mubr.bf16.gmra.mrb[0].mxu0 %v742
    %v850 = vpop.f32.mrb[0].mxu0
    %v851 = vadd.f32 %v721, %v850
    %v852 = vpop.f32.mrb[0].mxu0
    %v853 = vadd.f32 %v721, %v852
    %v854 = vpop.f32.mrb[0].mxu0
    %v855 = vadd.f32 %v726, %v854
    %v856 = vpop.f32.mrb[0].mxu0
    %v857 = vadd.f32 %v726, %v856
    %858 = vdwg.mxu0
    %v859 = vmax.f32 %v788, 0.0
    %v860 = vmax.f32 %v790, 0.0
    %v861 = vmax.f32 %v841, 0.0
    %v862 = vmax.f32 %v843, 0.0
    %v863 = vmax.f32 %v792, 0.0
    %v864 = vmax.f32 %v794, 0.0
    %v865 = vmax.f32 %v845, 0.0
    %v866 = vmax.f32 %v847, 0.0
    %v867 = vmax.f32 %v798, 0.0
    %v868 = vmax.f32 %v800, 0.0
    %v869 = vmax.f32 %v851, 0.0
    %v870 = vmax.f32 %v853, 0.0
    %v871 = vmax.f32 %v802, 0.0
    %v872 = vmax.f32 %v804, 0.0
    %v873 = vmax.f32 %v855, 0.0
    %v874 = vmax.f32 %v857, 0.0
    %v875 = vld [vmem:[%s6] sm:$0xf]
    %v876 = vpack.c.bf16 %v863, %v859
    %v877 = vpack.c.bf16 %v864, %v860
    %v878 = vpack.c.bf16 %v865, %v861
    %v879 = vpack.c.bf16 %v866, %v862
    %v880 = vpack.c.bf16 %v871, %v867
    %v881 = vpack.c.bf16 %v872, %v868
    %v882 = vpack.c.bf16 %v873, %v869
    %v883 = vpack.c.bf16 %v874, %v870
    %v884 = vld [vmem:[%s7] sm:$0xff]
    %886 = vset.pattern.permute.xlu0 0
    %887 = vperm.xlu0 %886, %v884
    %v888 = vpop.permute.xlu0 %887
    %vm890 = vcmask 261120
    %v892 = vsel %vm890, %v875, 0
    %894 = vmatprep.subr.bf16.mxu0 %v877
    %895 = vmatpush1.bf16.msra.mxu0 %v876
    %896 = vmatprep.subr.bf16.mxu0 %v881
    %897 = vmatpush1.bf16.msra.mxu0 %v880
    %898 = vmatprep.subr.bf16.mxu0 0
    %899 = vmatpush1.bf16.msra.mxu0 0
    %900 = vmatprep.subr.bf16.mxu0 0
    %901 = vmatpush1.bf16.msra.mxu0 0
    %902 = vmatprep.subr.bf16.mxu0 0
    %903 = vmatpush1.bf16.msra.mxu0 0
    %904 = vmatprep.subr.bf16.mxu0 0
    %905 = vmatpush1.bf16.msra.mxu0 0
    %906 = vmatprep.subr.bf16.mxu0 0
    %907 = vmatpush1.bf16.msra.mxu0 0
    %908 = vmatprep.subr.bf16.mxu0 0
    %909 = vmatpush1.bf16.msra.mxu0 0
    %910 = vmatprep.subr.bf16.mxu0 0
    %911 = vmatpush1.bf16.msra.mxu0 0
    %912 = vmatprep.subr.bf16.mxu0 0
    %913 = vmatpush1.bf16.msra.mxu0 0
    %914 = vmatprep.subr.bf16.mxu0 0
    %915 = vmatpush1.bf16.msra.mxu0 0
    %916 = vmatprep.subr.bf16.mxu0 0
    %917 = vmatpush1.bf16.msra.mxu0 0
    %918 = vmatprep.subr.bf16.mxu0 0
    %919 = vmatpush1.bf16.msra.mxu0 0
    %920 = vmatprep.subr.bf16.mxu0 0
    %921 = vmatpush1.bf16.msra.mxu0 0
    %922 = vmatprep.subr.bf16.mxu0 0
    %923 = vmatpush1.bf16.msra.mxu0 0
    %924 = vmatprep.subr.bf16.mxu0 0
    %925 = vmatpush1.bf16.msra.mxu0 0
    %926 = vmatprep.mubr.bf16.mxu0 0
    %927 = vmatmul.mubr.bf16.gmra.mrb[0].mxu0 %v892
    %v928 = vpop.f32.mrb[0].mxu0
    %v929 = vadd.f32 %v888, %v928
    %v930 = vpop.f32.mrb[0].mxu0
    %v931 = vadd.f32 %v888, %v930
    %v932 = vpop.f32.mrb[0].mxu0
    %v933 = vpop.f32.mrb[0].mxu0
    %934 = vdwg.mxu0
    %935 = vmatprep.subr.bf16.mxu0 %v879
    %936 = vmatpush1.bf16.msra.mxu0 %v878
    %937 = vmatprep.subr.bf16.mxu0 %v883
    %938 = vmatpush1.bf16.msra.mxu0 %v882
    %939 = vmatprep.subr.bf16.mxu0 0
    %940 = vmatpush1.bf16.msra.mxu0 0
    %941 = vmatprep.subr.bf16.mxu0 0
    %942 = vmatpush1.bf16.msra.mxu0 0
    %943 = vmatprep.subr.bf16.mxu0 0
    %944 = vmatpush1.bf16.msra.mxu0 0
    %945 = vmatprep.subr.bf16.mxu0 0
    %946 = vmatpush1.bf16.msra.mxu0 0
    %947 = vmatprep.subr.bf16.mxu0 0
    %948 = vmatpush1.bf16.msra.mxu0 0
    %949 = vmatprep.subr.bf16.mxu0 0
    %950 = vmatpush1.bf16.msra.mxu0 0
    %951 = vmatprep.subr.bf16.mxu0 0
    %952 = vmatpush1.bf16.msra.mxu0 0
    %953 = vmatprep.subr.bf16.mxu0 0
    %954 = vmatpush1.bf16.msra.mxu0 0
    %955 = vmatprep.subr.bf16.mxu0 0
    %956 = vmatpush1.bf16.msra.mxu0 0
    %957 = vmatprep.subr.bf16.mxu0 0
    %958 = vmatpush1.bf16.msra.mxu0 0
    %959 = vmatprep.subr.bf16.mxu0 0
    %960 = vmatpush1.bf16.msra.mxu0 0
    %961 = vmatprep.subr.bf16.mxu0 0
    %962 = vmatpush1.bf16.msra.mxu0 0
    %963 = vmatprep.subr.bf16.mxu0 0
    %964 = vmatpush1.bf16.msra.mxu0 0
    %965 = vmatprep.subr.bf16.mxu0 0
    %966 = vmatpush1.bf16.msra.mxu0 0
    %967 = vmatprep.mubr.bf16.mxu0 0
    %968 = vmatmul.mubr.bf16.gmra.mrb[0].mxu0 %v892
    %v969 = vpop.f32.mrb[0].mxu0
    %v970 = vadd.f32 %v888, %v969
    %v971 = vpop.f32.mrb[0].mxu0
    %v972 = vadd.f32 %v888, %v971
    %v973 = vpop.f32.mrb[0].mxu0
    %v974 = vpop.f32.mrb[0].mxu0
    %975 = vdwg.mxu0
    %v976 = vadd.f32 %v929, %v45
    %v977 = vadd.f32 %v931, %v46
    %v978 = vadd.f32 %v970, %v48
    %v979 = vadd.f32 %v972, %v49
    %v980 = vmax.f32 %v976, 0.0
    %v981 = vmax.f32 %v977, 0.0
    %v982 = vmax.f32 %v978, 0.0
    %v983 = vmax.f32 %v979, 0.0
    %984 = vst [vmem:[#allocation5] sm:$0xff] %v980
    %985 = vst [vmem:[#allocation5 + $0x8] sm:$0xff] %v981
    %s986 = scalar_lea.vmem [#allocation5], 16
    %987 = vst [vmem:[%s986] sm:$0xff] %v982
    %988 = vst [vmem:[%s986 + $0x8] sm:$0xff] %v983
    // Predicated region
    $region38: #{tpu_custom_call.1} parent=1 // pred_check
      _
    $region39: #{tpu_custom_call.1} parent=1 // pred_check_branch
      %990 = sbr.rel (0) target = $region41
    $region40: #{tpu_custom_call.1} parent=1 // pred_region
      %s992 = ssub.s32 512, 512
      %993 = vsyncadd [#allocation4], %s992
      %s994 = sshll.u32 [#allocation5], 4
      %s995 = int_to_ptr.vmem [resolvable:$true] %s994
      %1000 = dma.vmem_to_hbm [thread:$0]  %s995, 512, %s8, [#allocation4], 256, 256, 16
    $region41: #{tpu_custom_call.1} parent=1 // pred_fallthru
      _
    // Predicated region
    $region42: #{tpu_custom_call.1} parent=1 // pred_check
      _
    $region43: #{tpu_custom_call.1} parent=1 // pred_check_branch
      %1002 = sbr.rel (0) target = $region45
    $region44: #{tpu_custom_call.1} parent=1 // pred_region
      %1003 = dma.done [#allocation4], 512
    $region45: #{tpu_custom_call.1} parent=1 // pred_fallthru
      _
    %1004 = vsyncpa [#allocation3], 1
    %1005 = vsyncpa [#allocation4], 1

</llo_original>
